<compile_context>
chip_gen: v7x
topology: tpu7x:2x2x1
jax: 0.10.0
libtpu: 0.0.40
codegen_flags: <defaults>
</compile_context>

<pallas_src>
import functools

import jax
import jax.numpy as jnp
from jax.experimental import pallas as pl
from jax.experimental.pallas import tpu as pltpu


def _pooling_kernel(aux_ref, x_ref, o_ref, *, pool_size, width):
    """One (1, cb, H*W) block: separable avg-pool (count_include_pad=False)
    minus identity, done entirely with lane rolls + edge masks (no scratch)."""
    pad = pool_size // 2
    hw = x_ref.shape[-1]

    x = x_ref[0].astype(jnp.float32)            # (cb, HW)
    col = aux_ref[0:1, :]                       # (1, HW) f32 column index
    row = aux_ref[1:2, :]                       # (1, HW) f32 row index
    inv_cnt = aux_ref[2:3, :]                   # (1, HW) exact f32 1/count

    def window_sum(val, idx, flat_step):
        # val plus its valid neighbours at distances 1..pad along one image
        # axis.  A neighbour at distance d is a cyclic roll of the flat axis
        # by +/- d*flat_step (XLU slot, otherwise idle here).  Rolling the
        # matching index row by the same amount and keeping only positions
        # with |rolled_idx - idx| == d masks out every row / array
        # wrap-around, i.e. reproduces the zero padding exactly, and does not
        # depend on the roll sign convention.
        acc = val
        for d in range(1, pad + 1):
            for amt in (d * flat_step, hw - d * flat_step):
                val_s = pltpu.roll(val, amt, 1)
                idx_s = pltpu.roll(idx, amt, 1)
                valid = jnp.abs(idx_s - idx) == float(d)     # (1, HW) bool
                acc = acc + jnp.where(valid, val_s, 0.0)
        return acc

    hsum = window_sum(x, col, 1)            # horizontal taps (along W)
    s = window_sum(hsum, row, width)        # vertical taps (along H)
    o_ref[0] = (s * inv_cnt - x).astype(o_ref.dtype)


def _make_aux(H, W, pad):
    """(3, H*W) f32: [col_idx, row_idx, exact 1/count] for the flat layout."""
    rows = jnp.arange(H, dtype=jnp.int32)
    cols = jnp.arange(W, dtype=jnp.int32)
    rcnt = jnp.minimum(rows + pad, H - 1) - jnp.maximum(rows - pad, 0) + 1
    ccnt = jnp.minimum(cols + pad, W - 1) - jnp.maximum(cols - pad, 0) + 1
    inv_cnt = 1.0 / (rcnt[:, None] * ccnt[None, :]).astype(jnp.float32)
    row_idx = jnp.broadcast_to(rows[:, None], (H, W)).astype(jnp.float32)
    col_idx = jnp.broadcast_to(cols[None, :], (H, W)).astype(jnp.float32)
    return jnp.stack(
        [col_idx.reshape(-1), row_idx.reshape(-1), inv_cnt.reshape(-1)], axis=0
    )


def _pick_channel_block(n_batch, n_chan, hw):
    """Channels per block.  Keep f32 blocks <= ~1 MiB (>=85% of HBM roofline,
    comfortable in scoped VMEM on every generation incl. v7x), prefer full
    sublanes (cb % 8 == 0, or whole C when C has no such divisor), and prefer
    enough grid steps (>= 8 when the blocks stay big enough) so megacore
    sharding and DMA/compute pipelining have work to overlap."""
    bytes_per_chan = hw * 4
    cap_bytes = 1 << 20
    divisors = [d for d in range(1, n_chan + 1) if n_chan % d == 0]
    fits = [d for d in divisors if d * bytes_per_chan <= cap_bytes]
    sublane_ok = [d for d in fits if d % 8 == 0 or d == n_chan]
    cands = sorted(sublane_ok or fits or [1], reverse=True)
    cb = cands[0]
    for min_steps, min_bytes in ((8, 128 * 1024), (4, 128 * 1024), (2, 256 * 1024)):
        hit = next(
            (d for d in cands
             if n_batch * (n_chan // d) >= min_steps
             and d * bytes_per_chan >= min_bytes),
            None,
        )
        if hit is not None:
            cb = hit
            break
    return cb


def pooling(x, pool_size=3):
    """x: (N, C, H, W). Returns AvgPool2d(pool_size, stride=1, pad=pool_size//2,
    count_include_pad=False)(x) - x, same shape/dtype as x."""
    if pool_size % 2 != 1:
        # PyTorch AvgPool2d with even kernel and padding=k//2 changes H/W;
        # this kernel (like PoolFormer) assumes shape-preserving odd kernels.
        raise ValueError("pooling: only odd pool_size is supported")

    N, C, H, W = x.shape
    pad = pool_size // 2
    if H <= 2 * pad or W <= 2 * pad:
        raise ValueError("pooling: H and W must be larger than pool_size - 1")

    HW = H * W
    cb = _pick_channel_block(N, C, HW)

    xf = x.reshape(N, C, HW)                    # free, contiguous reshape
    aux = _make_aux(H, W, pad)                  # (3, HW) f32, VMEM-resident

    kernel = functools.partial(_pooling_kernel, pool_size=pool_size, width=W)

    out = pl.pallas_call(
        kernel,
        out_shape=jax.ShapeDtypeStruct((N, C, HW), x.dtype),
        grid_spec=pltpu.PrefetchScalarGridSpec(
            num_scalar_prefetch=0,
            grid=(N, C // cb),
            in_specs=[
                pl.BlockSpec((3, HW), lambda n, c: (0, 0)),       # aux (resident)
                pl.BlockSpec((1, cb, HW), lambda n, c: (n, c, 0)),
            ],
            out_specs=pl.BlockSpec((1, cb, HW), lambda n, c: (n, c, 0)),
        ),
        compiler_params=pltpu.CompilerParams(
            dimension_semantics=("parallel", "parallel"),
            vmem_limit_bytes=32 * 1024 * 1024,
        ),
    )(aux, xf)

    return out.reshape(N, C, H, W)              # free, contiguous reshape


def _reference(x, pool_size=3):
    """Pure-JAX reference matching nn.AvgPool2d(count_include_pad=False)(x) - x."""
    pad = pool_size // 2
    dims = (1, 1, pool_size, pool_size)
    strides = (1, 1, 1, 1)
    padding = ((0, 0), (0, 0), (pad, pad), (pad, pad))
    xf = x.astype(jnp.float32)
    s = jax.lax.reduce_window(xf, 0.0, jax.lax.add, dims, strides, padding)
    c = jax.lax.reduce_window(jnp.ones_like(xf), 0.0, jax.lax.add, dims, strides, padding)
    return (s / c - xf).astype(x.dtype)


if __name__ == "__main__":
    # `Pooling` has no learnable parameters; nothing to initialize.
    key = jax.random.PRNGKey(0)
    x = jax.random.normal(key, (2, 4, 16, 16), dtype=jnp.float32)

    pool_fn = jax.jit(functools.partial(pooling, pool_size=3))
    out = jax.block_until_ready(pool_fn(x))

    ref = _reference(x, pool_size=3)
    assert out.shape == x.shape and out.dtype == x.dtype
    assert jnp.allclose(out, ref, atol=1e-5, rtol=1e-5)

    print("KERNEL_OK")
</pallas_src>

<mosaic_0001>
module attributes {stable_mosaic.version = 11 : i64} {
  func.func @_pooling_kernel(%arg0: i32, %arg1: i32, %arg2: memref<3x256xf32, #tpu.memory_space<vmem>>, %arg3: memref<1x4x256xf32, #tpu.memory_space<vmem>>, %arg4: memref<1x4x256xf32, #tpu.memory_space<vmem>>) attributes {dimension_semantics = [#tpu.dimension_semantics<parallel>, #tpu.dimension_semantics<parallel>], iteration_bounds = array<i64: 2, 1>, scalar_prefetch = 0 : i64, scratch_operands = 0 : i64, tpu.core_type = #tpu.core_type<tc>, window_params = [{pipeline_mode = #tpu.pipeline_mode<synchronous>, transform_indices = @transform_0, window_bounds = array<i64: 3, 256>}, {transform_indices = @transform_1, window_bounds = array<i64: 1, 4, 256>}, {transform_indices = @transform_2, window_bounds = array<i64: 1, 4, 256>}]} {
    %c0 = arith.constant 0 : index
    %c0_0 = arith.constant 0 : index
    %c0_1 = arith.constant 0 : index
    %0 = vector.load %arg3[%c0, %c0_0, %c0_1] : memref<1x4x256xf32, #tpu.memory_space<vmem>>, vector<1x4x256xf32>
    %1 = vector.shape_cast %0 : vector<1x4x256xf32> to vector<4x256xf32>
    %c0_2 = arith.constant 0 : index
    %c0_3 = arith.constant 0 : index
    %2 = vector.load %arg2[%c0_2, %c0_3] : memref<3x256xf32, #tpu.memory_space<vmem>>, vector<1x256xf32>
    %c1 = arith.constant 1 : index
    %c0_4 = arith.constant 0 : index
    %3 = vector.load %arg2[%c1, %c0_4] : memref<3x256xf32, #tpu.memory_space<vmem>>, vector<1x256xf32>
    %c2 = arith.constant 2 : index
    %c0_5 = arith.constant 0 : index
    %4 = vector.load %arg2[%c2, %c0_5] : memref<3x256xf32, #tpu.memory_space<vmem>>, vector<1x256xf32>
    %c1_i32 = arith.constant 1 : i32
    %5 = tpu.dynamic_rotate %1 by %c1_i32 dim 1 : vector<4x256xf32>, i32 -> vector<4x256xf32>
    %c1_i32_6 = arith.constant 1 : i32
    %6 = tpu.dynamic_rotate %2 by %c1_i32_6 dim 1 : vector<1x256xf32>, i32 -> vector<1x256xf32>
    %7 = arith.subf %6, %2 : vector<1x256xf32>
    %8 = math.absf %7 : vector<1x256xf32>
    %cst = arith.constant 1.000000e+00 : f32
    %9 = vector.broadcast %cst : f32 to vector<1x256xf32>
    %10 = arith.cmpf oeq, %8, %9 : vector<1x256xf32>
    %cst_7 = arith.constant 0.000000e+00 : f32
    %11 = vector.shape_cast %10 : vector<1x256xi1> to vector<1x256xi1>
    %12 = vector.broadcast %11 : vector<1x256xi1> to vector<4x256xi1>
    %13 = vector.broadcast %cst_7 : f32 to vector<4x256xf32>
    %14 = arith.select %12, %5, %13 : vector<4x256xi1>, vector<4x256xf32>
    %15 = arith.addf %1, %14 : vector<4x256xf32>
    %c255_i32 = arith.constant 255 : i32
    %16 = tpu.dynamic_rotate %1 by %c255_i32 dim 1 : vector<4x256xf32>, i32 -> vector<4x256xf32>
    %c255_i32_8 = arith.constant 255 : i32
    %17 = tpu.dynamic_rotate %2 by %c255_i32_8 dim 1 : vector<1x256xf32>, i32 -> vector<1x256xf32>
    %18 = arith.subf %17, %2 : vector<1x256xf32>
    %19 = math.absf %18 : vector<1x256xf32>
    %cst_9 = arith.constant 1.000000e+00 : f32
    %20 = vector.broadcast %cst_9 : f32 to vector<1x256xf32>
    %21 = arith.cmpf oeq, %19, %20 : vector<1x256xf32>
    %cst_10 = arith.constant 0.000000e+00 : f32
    %22 = vector.shape_cast %21 : vector<1x256xi1> to vector<1x256xi1>
    %23 = vector.broadcast %22 : vector<1x256xi1> to vector<4x256xi1>
    %24 = vector.broadcast %cst_10 : f32 to vector<4x256xf32>
    %25 = arith.select %23, %16, %24 : vector<4x256xi1>, vector<4x256xf32>
    %26 = arith.addf %15, %25 : vector<4x256xf32>
    %c16_i32 = arith.constant 16 : i32
    %27 = tpu.dynamic_rotate %26 by %c16_i32 dim 1 : vector<4x256xf32>, i32 -> vector<4x256xf32>
    %c16_i32_11 = arith.constant 16 : i32
    %28 = tpu.dynamic_rotate %3 by %c16_i32_11 dim 1 : vector<1x256xf32>, i32 -> vector<1x256xf32>
    %29 = arith.subf %28, %3 : vector<1x256xf32>
    %30 = math.absf %29 : vector<1x256xf32>
    %cst_12 = arith.constant 1.000000e+00 : f32
    %31 = vector.broadcast %cst_12 : f32 to vector<1x256xf32>
    %32 = arith.cmpf oeq, %30, %31 : vector<1x256xf32>
    %cst_13 = arith.constant 0.000000e+00 : f32
    %33 = vector.shape_cast %32 : vector<1x256xi1> to vector<1x256xi1>
    %34 = vector.broadcast %33 : vector<1x256xi1> to vector<4x256xi1>
    %35 = vector.broadcast %cst_13 : f32 to vector<4x256xf32>
    %36 = arith.select %34, %27, %35 : vector<4x256xi1>, vector<4x256xf32>
    %37 = arith.addf %26, %36 : vector<4x256xf32>
    %c240_i32 = arith.constant 240 : i32
    %38 = tpu.dynamic_rotate %26 by %c240_i32 dim 1 : vector<4x256xf32>, i32 -> vector<4x256xf32>
    %c240_i32_14 = arith.constant 240 : i32
    %39 = tpu.dynamic_rotate %3 by %c240_i32_14 dim 1 : vector<1x256xf32>, i32 -> vector<1x256xf32>
    %40 = arith.subf %39, %3 : vector<1x256xf32>
    %41 = math.absf %40 : vector<1x256xf32>
    %cst_15 = arith.constant 1.000000e+00 : f32
    %42 = vector.broadcast %cst_15 : f32 to vector<1x256xf32>
    %43 = arith.cmpf oeq, %41, %42 : vector<1x256xf32>
    %cst_16 = arith.constant 0.000000e+00 : f32
    %44 = vector.shape_cast %43 : vector<1x256xi1> to vector<1x256xi1>
    %45 = vector.broadcast %44 : vector<1x256xi1> to vector<4x256xi1>
    %46 = vector.broadcast %cst_16 : f32 to vector<4x256xf32>
    %47 = arith.select %45, %38, %46 : vector<4x256xi1>, vector<4x256xf32>
    %48 = arith.addf %37, %47 : vector<4x256xf32>
    %49 = vector.broadcast %4 : vector<1x256xf32> to vector<4x256xf32>
    %50 = arith.mulf %48, %49 : vector<4x256xf32>
    %51 = arith.subf %50, %1 : vector<4x256xf32>
    %c0_17 = arith.constant 0 : index
    %c0_18 = arith.constant 0 : index
    %c0_19 = arith.constant 0 : index
    %52 = vector.load %arg4[%c0_17, %c0_18, %c0_19] : memref<1x4x256xf32, #tpu.memory_space<vmem>>, vector<1x4x256xf32>
    %53 = vector.shape_cast %52 : vector<1x4x256xf32> to vector<4x256xf32>
    %54 = vector.shape_cast %51 : vector<4x256xf32> to vector<1x4x256xf32>
    tpu.vector_store %arg4[%c0_17, %c0_18, %c0_19], %54 {strides = array<i32>} : memref<1x4x256xf32, #tpu.memory_space<vmem>>, vector<1x4x256xf32>,
    return
  }
  func.func @transform_0(%arg0: i32, %arg1: i32) -> (i32, i32) {
    %c0_i32 = arith.constant 0 : i32
    %c0_i32_0 = arith.constant 0 : i32
    %c0_i32_1 = arith.constant 0 : i32
    return %c0_i32, %c0_i32_0 : i32, i32
  }
  func.func @transform_1(%arg0: i32, %arg1: i32) -> (i32, i32, i32) {
    %c0_i32 = arith.constant 0 : i32
    %c0_i32_0 = arith.constant 0 : i32
    return %arg0, %arg1, %c0_i32 : i32, i32, i32
  }
  func.func @transform_2(%arg0: i32, %arg1: i32) -> (i32, i32, i32) {
    %c0_i32 = arith.constant 0 : i32
    %c0_i32_0 = arith.constant 0 : i32
    return %arg0, %arg1, %c0_i32 : i32, i32, i32
  }
}

</mosaic_0001>

<llo_original>
// kernel: pooling.1
$region0: #{pooling.1}
  #allocation0 [shape = 'u32[]', space=smem, size = 0x4, offset = 0x4, fixed_abs, tag = 'smem constant byte address 0x4 - core index']
  #allocation1 [shape = 'u32[144,128]{1,0:T(1,128)}', space=vmem, size = 0x12000, scoped, tag = 'internal scratch']
  %s0 = inlined_call_operand.vmem [shape: f32[3,256], index: 0, kind: input, shape index: {}]
  %s1 = inlined_call_operand.vmem [shape: f32[2,4,256], index: 1, kind: input, shape index: {}]
  %s2 = inlined_call_operand.vmem [shape: f32[2,4,256], index: 2, kind: output, shape index: {}]
  %s3 = sld [smem:[#allocation0]]
  $region41: #{pooling.1} parent=0
    _
  %s5 = ssub.s32 1, %s3
  %s6 = scalar_select 0, %s5, %s3
  loop: start=0, step=1, limit=4
  $region2: #{pooling.1} parent=0 // loop_pre_header
    _
  $region3: #{pooling.1} parent=0 // loop_header
    %s8 = sphi 0, %s12
    %p9 = scmp.ge.s32.totalorder %s8, 4
    %s15 = sphi 0, %s27
    %s16 = sphi 0, %s23
    %s17 = sphi 0, %s15
    %s18 = sphi 0, %s16
    %s19 = sphi 0, %s17
    %s20 = sphi 0, %s18
    %s28 = sphi 0, %s28
    %s30 = sphi 0, %s28
    %s31 = sphi 0, %s30
    %s45 = sphi 0, %s31
    %s53 = sphi 0, %s55
    %s56 = sphi 0, %s53
    %s57 = sphi 0, %s56
    %s73 = sphi 0, %s57
    %s81 = sphi 0, %s83
    %s84 = sphi 0, %s81
    %s85 = sphi 0, %s84
    %s101 = sphi 0, %s85
  $region4: #{pooling.1} parent=0 // loop_header_branch
    %11 = sbr.rel (%p9) target = $region8
  $region5: #{pooling.1} parent=0 // loop_body
    %s13 = ssub.s32 %s8, 1
    %s14 = ssub.s32 %s8, 2
    %s21 = sadd.s32 1, %s16
    %p22 = scmp.ge.s32.totalorder %s21, 1
    %s23 = scalar_select %p22, 0, %s21
    %s24 = sadd.s32 1, %s15
    %s25 = scalar_select %p22, %s24, %s15
    %p26 = scmp.ge.s32.totalorder %s25, 2
    %s27 = scalar_select %p26, 0, %s25
    %s29 = sadd.s32 %s28, 1
    %p32 = scmp.eq.s32.totalorder %s8, 1
    %p33 = scmp.ne.s32.totalorder %s28, %s30
    %p34 = scmp.eq.s32.totalorder %s8, 0
    %p35 = por %p33, %p34
    %p36 = scmp.ne.s32.totalorder %s28, %s30
    %p37 = scmp.eq.s32.totalorder %s13, 1
    %p38 = por %p36, %p37
    %p39 = scmp.ne.s32.totalorder %s30, %s31
    %p40 = scmp.eq.s32.totalorder %s13, 0
    %p41 = por %p39, %p40
    %p42 = scmp.ne.s32.totalorder %s30, %s31
    %p43 = scmp.eq.s32.totalorder %s14, 1
    %p44 = por %p42, %p43
    %p46 = scmp.ne.s32.totalorder %s31, %s45
    %p47 = scmp.eq.s32.totalorder %s14, 0
    %p48 = por %p46, %p47
    %s49 = ssub.s32 %s15, %s27
    %s50 = ssub.s32 %s16, %s23
    %s51 = sor.u32 %s49, %s50
    %p52 = scmp.eq.s32.totalorder %s51, 0
    %s54 = sadd.s32 %s53, 1
    %s55 = scalar_select %p52, %s53, %s54
    %p58 = pneg %p52
    %p59 = scmp.eq.s32.totalorder %s8, 1
    %p60 = por %p58, %p59
    %p61 = scmp.ne.s32.totalorder %s53, %s56
    %p62 = scmp.eq.s32.totalorder %s8, 0
    %p63 = por %p61, %p62
    %p64 = scmp.ne.s32.totalorder %s53, %s56
    %p65 = scmp.eq.s32.totalorder %s13, 1
    %p66 = por %p64, %p65
    %p67 = scmp.ne.s32.totalorder %s56, %s57
    %p68 = scmp.eq.s32.totalorder %s13, 0
    %p69 = por %p67, %p68
    %p70 = scmp.ne.s32.totalorder %s56, %s57
    %p71 = scmp.eq.s32.totalorder %s14, 1
    %p72 = por %p70, %p71
    %p74 = scmp.ne.s32.totalorder %s57, %s73
    %p75 = scmp.eq.s32.totalorder %s14, 0
    %p76 = por %p74, %p75
    %s77 = ssub.s32 %s15, %s27
    %s78 = ssub.s32 %s16, %s23
    %s79 = sor.u32 %s77, %s78
    %p80 = scmp.eq.s32.totalorder %s79, 0
    %s82 = sadd.s32 %s81, 1
    %s83 = scalar_select %p80, %s81, %s82
    %p86 = pneg %p80
    %p87 = scmp.eq.s32.totalorder %s8, 1
    %p88 = por %p86, %p87
    %p89 = scmp.ne.s32.totalorder %s81, %s84
    %p90 = scmp.eq.s32.totalorder %s8, 0
    %p91 = por %p89, %p90
    %p92 = scmp.ne.s32.totalorder %s81, %s84
    %p93 = scmp.eq.s32.totalorder %s13, 1
    %p94 = por %p92, %p93
    %p95 = scmp.ne.s32.totalorder %s84, %s85
    %p96 = scmp.eq.s32.totalorder %s13, 0
    %p97 = por %p95, %p96
    %p98 = scmp.ne.s32.totalorder %s84, %s85
    %p99 = scmp.eq.s32.totalorder %s14, 1
    %p100 = por %p98, %p99
    %p102 = scmp.ne.s32.totalorder %s85, %s101
    %p103 = scmp.eq.s32.totalorder %s14, 0
    %p104 = por %p102, %p103
    %p105 = scmp.le.s32.totalorder 1, %s8
    %p106 = scmp.lt.s32.totalorder %s8, 3
    %p107 = pnand %p105, %p106
    %p108 = pneg %p107
    // Predicated region
    $region9: #{pooling.1} parent=5 // pred_check
      _
    $region10: #{pooling.1} parent=5 // pred_check_branch
      %110 = sbr.rel (%p107) target = $region12
    $region11: #{pooling.1} parent=5 // pred_region
      %s111 = ssub.s32 %s8, 1
      // Predicated region
      $region13: #{pooling.1} parent=11 // pred_check
        %p112 = pneg %p41
      $region14: #{pooling.1} parent=11 // pred_check_branch
        %114 = sbr.rel (%p112) target = $region16
      $region15: #{pooling.1} parent=11 // pred_region
        _
      $region16: #{pooling.1} parent=11 // pred_fallthru
        _
    $region12: #{pooling.1} parent=5 // pred_fallthru
      _
    %p115 = scmp.lt.s32.totalorder %s8, 2
    // Predicated region
    $region17: #{pooling.1} parent=5 // pred_check
      %p116 = pneg %p115
    $region18: #{pooling.1} parent=5 // pred_check_branch
      %118 = sbr.rel (%p116) target = $region20
    $region19: #{pooling.1} parent=5 // pred_region
      // Predicated region
      $region21: #{pooling.1} parent=19 // pred_check
        %p119 = pneg %p63
      $region22: #{pooling.1} parent=19 // pred_check_branch
        %121 = sbr.rel (%p119) target = $region24
      $region23: #{pooling.1} parent=19 // pred_region
        %p122 = scmp.lt.s32.totalorder %s15, 1
        %s123 = scalar_select %p122, %s15, 1
        %p124 = scmp.lt.s32.totalorder %s16, 0
        %s125 = scalar_select %p124, %s16, 0
        %s126 = smul.addr %s125, 2
        %s127 = smul.addr %s123, 2
        %s128 = sadd.s32 %s126, %s127
        %s129 = smul.addr %s128, 4
        %s130 = scalar_lea.vmem %s1, %s129
      $region24: #{pooling.1} parent=19 // pred_fallthru
        _
    $region20: #{pooling.1} parent=5 // pred_fallthru
      _
    %p131 = scmp.le.s32.totalorder 1, %s8
    %p132 = scmp.lt.s32.totalorder %s8, 3
    %p133 = pnand %p131, %p132
    %p134 = pneg %p133
    // Predicated region
    $region25: #{pooling.1} parent=5 // pred_check
      _
    $region26: #{pooling.1} parent=5 // pred_check_branch
      %136 = sbr.rel (%p133) target = $region28
    $region27: #{pooling.1} parent=5 // pred_region
      %s137 = ssub.s32 %s8, 1
      %p138 = pneg %p41
      %p139 = pneg %p38
      %p140 = scmp.lt.s32.totalorder %s17, 1
      %s141 = scalar_select %p140, %s17, 1
      %p142 = scmp.lt.s32.totalorder %s18, 0
      %s143 = scalar_select %p142, %s18, 0
      %s144 = smul.addr %s143, 2
      %s145 = smul.addr %s141, 2
      %s146 = sadd.s32 %s144, %s145
      %s147 = smul.addr %s146, 4
      %s148 = scalar_lea.vmem %s1, %s147
      %p149 = pneg %p69
      %p150 = pneg %p66
      %p151 = pneg %p97
      %p152 = pneg %p94
      %p153 = scmp.lt.s32.totalorder %s17, 1
      %s154 = scalar_select %p153, %s17, 1
      %p155 = scmp.lt.s32.totalorder %s18, 0
      %s156 = scalar_select %p155, %s18, 0
      %s157 = smul.addr %s156, 2
      %s158 = smul.addr %s154, 2
      %s159 = sadd.s32 %s157, %s158
      %s160 = smul.addr %s159, 4
      %s161 = scalar_lea.vmem %s2, %s160
      %p162 = scmp.lt.s32.totalorder %s17, 1
      %s163 = scalar_select %p162, %s17, 1
      %p164 = scmp.lt.s32.totalorder %s18, 0
      %s165 = scalar_select %p164, %s18, 0
      %s166 = smul.addr %s165, 2
      %s167 = smul.addr %s163, 2
      %s168 = sadd.s32 %s166, %s167
      %s169 = smul.addr %s168, 4
      %s170 = scalar_lea.vmem %s1, %s169
      %p171 = scmp.lt.s32.totalorder %s17, 1
      %s172 = scalar_select %p171, %s17, 1
      %p173 = scmp.lt.s32.totalorder %s18, 0
      %s174 = scalar_select %p173, %s18, 0
      %s175 = smul.addr %s174, 2
      %s176 = smul.addr %s172, 2
      %s177 = sadd.s32 %s175, %s176
      %s178 = smul.addr %s177, 4
      %s179 = scalar_lea.vmem %s2, %s178
      %v180 = vld [vmem:[%s170] sm:$0xff]
      %v181 = vld [vmem:[%s0] ss:$4 sm:$0x3]
      %s182 = scalar_lea.vmem %s0, 1
      %v183 = vld [vmem:[%s182] ss:$4 sm:$0x3]
      %s184 = scalar_lea.vmem %s0, 2
      %v185 = vld [vmem:[%s184] ss:$4 sm:$0x3]
      %v187 = vcombine.high %v180, %v180
      %189 = vrot.lane.b32.xlu0 %v180, 1
      %v190 = vpop.permute.xlu0 %189
      %191 = vrot.lane.b32.xlu0 %v187, 1
      %v192 = vpop.permute.xlu0 %191
      %v193 = vlaneseq
      %v194 = vand.u32 %v193, 127
      %vm195 = vcmp.lt.s32.totalorder %v194, 1
      %v196 = vsel %vm195, %v190, %v192
      %v197 = vsel %vm195, %v192, %v190
      %v199 = vlaneseq
      %v200 = vshrl.u32 %v199, 7
      %v201 = vsub.s32 0, %v200
      %v202 = vrot.slane %v181, %v201
      %v203 = vlaneseq
      %v204 = vshrl.u32 %v203, 7
      %v205 = vsub.s32 1, %v204
      %v206 = vrot.slane %v181, %v205
      %209 = vrot.lane.b32.xlu0 %v202, 1
      %v210 = vpop.permute.xlu0 %209
      %211 = vrot.lane.b32.xlu0 %v206, 1
      %v212 = vpop.permute.xlu0 %211
      %v213 = vsel %vm195, %v210, %v212
      %v214 = vsel %vm195, %v212, %v210
      %v215 = vsub.f32 %v214, %v202
      %v216 = vsub.f32 %v213, %v206
      %v217 = vand.u32 2147483647, %v215
      %v218 = vand.u32 2147483647, %v216
      %vm219 = vcmp.eq.f32.partialorder %v217, 1.0
      %vm220 = vcmp.eq.f32.partialorder %v218, 1.0
      %v221 = vsel %vm219, 1, 0
      %v222 = vsel %vm220, 1, 0
      %v223 = vlaneseq
      %v224 = vshrl.u32 %v223, 7
      %v225 = vsub.s32 0, %v224
      %v226 = vrot.slane %v221, %v225
      %v227 = vlaneseq
      %v228 = vshrl.u32 %v227, 7
      %v229 = vsub.s32 0, %v228
      %v230 = vrot.slane %v222, %v229
      %vm231 = vcmp.eq.s32.totalorder %v226, 1
      %vm232 = vcmp.eq.s32.totalorder %v230, 1
      %v233 = vsel %vm231, %v197, 0.0
      %v234 = vsel %vm232, %v196, 0.0
      %v237 = vcombine.low %v233, %v234
      %v239 = vadd.f32 %v180, %v237
      %240 = vrot.lane.b32.xlu0 %v180, 127
      %v241 = vpop.permute.xlu0 %240
      %242 = vrot.lane.b32.xlu0 %v187, 127
      %v243 = vpop.permute.xlu0 %242
      %vm244 = vcmp.lt.s32.totalorder %v194, 127
      %v245 = vsel %vm244, %v241, %v243
      %v246 = vsel %vm244, %v243, %v241
      %247 = vrot.lane.b32.xlu0 %v202, 127
      %v248 = vpop.permute.xlu0 %247
      %249 = vrot.lane.b32.xlu0 %v206, 127
      %v250 = vpop.permute.xlu0 %249
      %v251 = vsel %vm244, %v248, %v250
      %v252 = vsel %vm244, %v250, %v248
      %v253 = vsub.f32 %v251, %v202
      %v254 = vsub.f32 %v252, %v206
      %v255 = vand.u32 2147483647, %v253
      %v256 = vand.u32 2147483647, %v254
      %vm257 = vcmp.eq.f32.partialorder %v255, 1.0
      %vm258 = vcmp.eq.f32.partialorder %v256, 1.0
      %v259 = vsel %vm257, 1, 0
      %v260 = vsel %vm258, 1, 0
      %v261 = vlaneseq
      %v262 = vshrl.u32 %v261, 7
      %v263 = vsub.s32 0, %v262
      %v264 = vrot.slane %v259, %v263
      %v265 = vlaneseq
      %v266 = vshrl.u32 %v265, 7
      %v267 = vsub.s32 0, %v266
      %v268 = vrot.slane %v260, %v267
      %vm269 = vcmp.eq.s32.totalorder %v264, 1
      %vm270 = vcmp.eq.s32.totalorder %v268, 1
      %v271 = vsel %vm269, %v245, 0.0
      %v272 = vsel %vm270, %v246, 0.0
      %v275 = vcombine.low %v271, %v272
      %v277 = vadd.f32 %v239, %v275
      %v279 = vcombine.high %v277, %v277
      %281 = vrot.lane.b32.xlu0 %v277, 16
      %v282 = vpop.permute.xlu0 %281
      %283 = vrot.lane.b32.xlu0 %v279, 16
      %v284 = vpop.permute.xlu0 %283
      %vm285 = vcmp.lt.s32.totalorder %v194, 16
      %v286 = vsel %vm285, %v282, %v284
      %v287 = vsel %vm285, %v284, %v282
      %v289 = vlaneseq
      %v290 = vshrl.u32 %v289, 7
      %v291 = vsub.s32 0, %v290
      %v292 = vrot.slane %v183, %v291
      %v293 = vlaneseq
      %v294 = vshrl.u32 %v293, 7
      %v295 = vsub.s32 1, %v294
      %v296 = vrot.slane %v183, %v295
      %299 = vrot.lane.b32.xlu0 %v292, 16
      %v300 = vpop.permute.xlu0 %299
      %301 = vrot.lane.b32.xlu0 %v296, 16
      %v302 = vpop.permute.xlu0 %301
      %v303 = vsel %vm285, %v300, %v302
      %v304 = vsel %vm285, %v302, %v300
      %v305 = vsub.f32 %v304, %v292
      %v306 = vsub.f32 %v303, %v296
      %v307 = vand.u32 2147483647, %v305
      %v308 = vand.u32 2147483647, %v306
      %vm309 = vcmp.eq.f32.partialorder %v307, 1.0
      %vm310 = vcmp.eq.f32.partialorder %v308, 1.0
      %v311 = vsel %vm309, 1, 0
      %v312 = vsel %vm310, 1, 0
      %v313 = vlaneseq
      %v314 = vshrl.u32 %v313, 7
      %v315 = vsub.s32 0, %v314
      %v316 = vrot.slane %v311, %v315
      %v317 = vlaneseq
      %v318 = vshrl.u32 %v317, 7
      %v319 = vsub.s32 0, %v318
      %v320 = vrot.slane %v312, %v319
      %vm321 = vcmp.eq.s32.totalorder %v316, 1
      %vm322 = vcmp.eq.s32.totalorder %v320, 1
      %v323 = vsel %vm321, %v287, 0.0
      %v324 = vsel %vm322, %v286, 0.0
      %v327 = vcombine.low %v323, %v324
      %v329 = vadd.f32 %v277, %v327
      %330 = vrot.lane.b32.xlu0 %v277, 112
      %v331 = vpop.permute.xlu0 %330
      %332 = vrot.lane.b32.xlu0 %v279, 112
      %v333 = vpop.permute.xlu0 %332
      %vm334 = vcmp.lt.s32.totalorder %v194, 112
      %v335 = vsel %vm334, %v331, %v333
      %v336 = vsel %vm334, %v333, %v331
      %337 = vrot.lane.b32.xlu0 %v292, 112
      %v338 = vpop.permute.xlu0 %337
      %339 = vrot.lane.b32.xlu0 %v296, 112
      %v340 = vpop.permute.xlu0 %339
      %v341 = vsel %vm334, %v338, %v340
      %v342 = vsel %vm334, %v340, %v338
      %v343 = vsub.f32 %v341, %v292
      %v344 = vsub.f32 %v342, %v296
      %v345 = vand.u32 2147483647, %v343
      %v346 = vand.u32 2147483647, %v344
      %vm347 = vcmp.eq.f32.partialorder %v345, 1.0
      %vm348 = vcmp.eq.f32.partialorder %v346, 1.0
      %v349 = vsel %vm347, 1, 0
      %v350 = vsel %vm348, 1, 0
      %v351 = vlaneseq
      %v352 = vshrl.u32 %v351, 7
      %v353 = vsub.s32 0, %v352
      %v354 = vrot.slane %v349, %v353
      %v355 = vlaneseq
      %v356 = vshrl.u32 %v355, 7
      %v357 = vsub.s32 0, %v356
      %v358 = vrot.slane %v350, %v357
      %vm359 = vcmp.eq.s32.totalorder %v354, 1
      %vm360 = vcmp.eq.s32.totalorder %v358, 1
      %v361 = vsel %vm359, %v335, 0.0
      %v362 = vsel %vm360, %v336, 0.0
      %v365 = vcombine.low %v361, %v362
      %v367 = vadd.f32 %v329, %v365
      %v369 = vlaneseq
      %v370 = vshrl.u32 %v369, 7
      %v371 = vsub.s32 0, %v370
      %v372 = vrot.slane %v185, %v371
      %v373 = vlaneseq
      %v374 = vshrl.u32 %v373, 7
      %v375 = vsub.s32 1, %v374
      %v376 = vrot.slane %v185, %v375
      %v377 = vcombine.low %v372, %v376
      %v379 = vmul.f32 %v367, %v377
      %v380 = vsub.f32 %v379, %v180
      %381 = vst [vmem:[%s179] sm:$0xff] %v380
      %p382 = scmp.lt.s32.totalorder %s17, 1
      %s383 = scalar_select %p382, %s17, 1
      %p384 = scmp.lt.s32.totalorder %s18, 0
      %s385 = scalar_select %p384, %s18, 0
      %s386 = smul.addr %s385, 2
      %s387 = smul.addr %s383, 2
      %s388 = sadd.s32 %s386, %s387
      %s389 = smul.addr %s388, 4
      %s390 = scalar_lea.vmem %s2, %s389
      // Predicated region
      $region29: #{pooling.1} parent=27 // pred_check
        %p391 = pneg %p94
      $region30: #{pooling.1} parent=27 // pred_check_branch
        %393 = sbr.rel (%p391) target = $region32
      $region31: #{pooling.1} parent=27 // pred_region
        _
      $region32: #{pooling.1} parent=27 // pred_fallthru
        _
    $region28: #{pooling.1} parent=5 // pred_fallthru
      _
    %p394 = scmp.le.s32.totalorder 2, %s8
    // Predicated region
    $region33: #{pooling.1} parent=5 // pred_check
      %p395 = pneg %p394
    $region34: #{pooling.1} parent=5 // pred_check_branch
      %397 = sbr.rel (%p395) target = $region36
    $region35: #{pooling.1} parent=5 // pred_region
      %s398 = ssub.s32 %s8, 2
      // Predicated region
      $region37: #{pooling.1} parent=35 // pred_check
        %p399 = pneg %p100
      $region38: #{pooling.1} parent=35 // pred_check_branch
        %401 = sbr.rel (%p399) target = $region40
      $region39: #{pooling.1} parent=35 // pred_region
        %p402 = scmp.lt.s32.totalorder %s19, 1
        %s403 = scalar_select %p402, %s19, 1
        %p404 = scmp.lt.s32.totalorder %s20, 0
        %s405 = scalar_select %p404, %s20, 0
        %s406 = smul.addr %s405, 2
        %s407 = smul.addr %s403, 2
        %s408 = sadd.s32 %s406, %s407
        %s409 = smul.addr %s408, 4
        %s410 = scalar_lea.vmem %s2, %s409
      $region40: #{pooling.1} parent=35 // pred_fallthru
        _
    $region36: #{pooling.1} parent=5 // pred_fallthru
      _
  $region6: #{pooling.1} parent=0 // loop_footer
    %s12 = sadd.s32 1, %s8
  $region7: #{pooling.1} parent=0 // loop_footer_branch
    %7 = sbr.rel target = $region3
  $region8: #{pooling.1} parent=0 // loop_exit
    _

</llo_original>
